<compile_context>
chip_gen: v5e
topology: v5e:2x2
jax: 0.10.0
libtpu: 0.0.40
codegen_flags: <defaults>
</compile_context>

<pallas_src>
import functools
import math

import jax
import jax.numpy as jnp
from jax.experimental import pallas as pl
from jax.experimental.pallas import tpu as pltpu

EPS = 1e-5  # nn.LayerNorm default


# ---------------------------------------------------------------------------
# in-kernel helpers
# ---------------------------------------------------------------------------
def _layernorm(x, w, b):
    mu = jnp.mean(x, axis=-1, keepdims=True)
    var = jnp.mean(jnp.square(x - mu), axis=-1, keepdims=True)
    return (x - mu) * jax.lax.rsqrt(var + EPS) * w + b


def _gelu_exact(x):
    # nn.GELU() default is the exact erf formulation.
    return 0.5 * x * (1.0 + jax.lax.erf(x * (1.0 / math.sqrt(2.0))))


# ---------------------------------------------------------------------------
# fused per-layer kernel:  attention block + feed-forward block (+ final LN)
# ---------------------------------------------------------------------------
def layer_kernel(x_ref, aln_w_ref, aln_b_ref, wqkv_ref, wout_ref,
                 fln_w_ref, fln_b_ref, w1_ref, b1_ref, w2_ref, b2_ref,
                 nrm_w_ref, nrm_b_ref, o_ref,
                 *, heads, dim_head, tq, apply_final_ln):
    """x_ref: (N, D) f32 full sequence for this batch element.
       o_ref: (TQ, D) f32 query tile.
       wqkv: (D, 3*inner) bf16 (Q columns pre-scaled by dim_head**-0.5);
       wout: (inner, D) bf16; w1: (D, H) bf16; w2: (H, D) bf16."""
    n = x_ref.shape[0]
    inner = heads * dim_head
    qi = pl.program_id(1)

    x_full = x_ref[...]                                              # (N, D) f32
    xn = _layernorm(x_full, aln_w_ref[...], aln_b_ref[...])          # (N, D) f32
    xn_bf = xn.astype(jnp.bfloat16)
    w_qkv = wqkv_ref[...]                                            # (D, 3I) bf16

    if tq == n:
        # single query tile: one fused (N, D) @ (D, 3I) matmul
        x_q = x_full
        qkv = jnp.dot(xn_bf, w_qkv, preferred_element_type=jnp.float32)   # (N, 3I)
        q = qkv[:, :inner]
        k = qkv[:, inner:2 * inner]
        v = qkv[:, 2 * inner:]
    else:
        # K/V from the full sequence, Q only for this query tile
        q_start = pl.multiple_of(qi * tq, tq)
        x_q = x_ref[pl.ds(q_start, tq), :]                                # (TQ, D)
        xn_q = _layernorm(x_q, aln_w_ref[...], aln_b_ref[...]).astype(jnp.bfloat16)
        q = jnp.dot(xn_q, w_qkv[:, :inner],
                    preferred_element_type=jnp.float32)                   # (TQ, I)
        kv = jnp.dot(xn_bf, w_qkv[:, inner:],
                     preferred_element_type=jnp.float32)                  # (N, 2I)
        k = kv[:, :inner]
        v = kv[:, inner:]

    # ---- per-head attention (softmax scale already folded into Q weights) ----
    q_bf = q.astype(jnp.bfloat16)
    k_bf = k.astype(jnp.bfloat16)
    v_bf = v.astype(jnp.bfloat16)
    head_outs = []
    for h in range(heads):                       # heads is small and static
        sl = slice(h * dim_head, (h + 1) * dim_head)
        s = jax.lax.dot_general(q_bf[:, sl], k_bf[:, sl],
                                (((1,), (1,)), ((), ())),
                                preferred_element_type=jnp.float32)       # (TQ, N)
        s = s - jnp.max(s, axis=-1, keepdims=True)
        p = jnp.exp(s)
        p = p * pl.reciprocal(jnp.sum(p, axis=-1, keepdims=True), approx=True)
        head_outs.append(jnp.dot(p.astype(jnp.bfloat16), v_bf[:, sl],
                                 preferred_element_type=jnp.float32))     # (TQ, dh)
    attn = jnp.concatenate(head_outs, axis=-1)                            # (TQ, I)
    attn = jnp.dot(attn.astype(jnp.bfloat16), wout_ref[...],
                   preferred_element_type=jnp.float32)                    # (TQ, D)
    x1 = attn + x_q                                                       # residual

    # ---- feed-forward block ----
    xn2 = _layernorm(x1, fln_w_ref[...], fln_b_ref[...]).astype(jnp.bfloat16)
    hdn = jnp.dot(xn2, w1_ref[...], preferred_element_type=jnp.float32) + b1_ref[...]
    hdn = _gelu_exact(hdn)
    y = jnp.dot(hdn.astype(jnp.bfloat16), w2_ref[...],
                preferred_element_type=jnp.float32) + b2_ref[...]
    out = y + x1                                                          # residual

    if apply_final_ln:                         # trailing Transformer LayerNorm
        out = _layernorm(out, nrm_w_ref[...], nrm_b_ref[...])
    o_ref[...] = out.astype(o_ref.dtype)


def final_ln_kernel(x_ref, w_ref, b_ref, o_ref):
    # only used when depth == 0
    o_ref[...] = _layernorm(x_ref[...], w_ref[...], b_ref[...]).astype(o_ref.dtype)


# ---------------------------------------------------------------------------
# wrappers
# ---------------------------------------------------------------------------
def _const_spec(shape):
    zeros = (0,) * len(shape)
    return pl.BlockSpec(shape, lambda b, q, _z=zeros: _z)


def prepare_params(params, *, heads, dim_head):
    """One-time parameter prep: fold the softmax scale into the Q columns of the
    fused QKV weight and cast all matmul weights to bfloat16 (LN params / biases
    stay float32)."""
    inner = heads * dim_head
    scale = dim_head ** -0.5
    layers = []
    for layer in params["layers"]:
        wqkv = layer["wqkv"].at[:, :inner].multiply(scale)
        layers.append(dict(
            attn_ln_w=layer["attn_ln_w"], attn_ln_b=layer["attn_ln_b"],
            wqkv=wqkv.astype(jnp.bfloat16),
            wout=layer["wout"].astype(jnp.bfloat16),
            ff_ln_w=layer["ff_ln_w"], ff_ln_b=layer["ff_ln_b"],
            w1=layer["w1"].astype(jnp.bfloat16), b1=layer["b1"],
            w2=layer["w2"].astype(jnp.bfloat16), b2=layer["b2"],
        ))
    return dict(layers=layers, norm_w=params["norm_w"], norm_b=params["norm_b"])


def transformer_forward(x, params, *, heads, dim_head, q_block=128):
    B, N, D = x.shape
    tq = N if N <= q_block else q_block
    assert N % tq == 0, "sequence length must be divisible by the query tile"
    nq = N // tq

    x_spec = pl.BlockSpec((None, N, D), lambda b, q: (b, 0, 0))
    out_spec = pl.BlockSpec((None, tq, D), lambda b, q: (b, q, 0))
    out_shape = jax.ShapeDtypeStruct((B, N, D), x.dtype)
    cp = pltpu.CompilerParams(dimension_semantics=("parallel", "parallel"))

    layers = params["layers"]
    for li, layer in enumerate(layers):
        kern = functools.partial(layer_kernel, heads=heads, dim_head=dim_head,
                                 tq=tq, apply_final_ln=(li == len(layers) - 1))
        in_arrays = (x,
                     layer["attn_ln_w"], layer["attn_ln_b"],
                     layer["wqkv"], layer["wout"],
                     layer["ff_ln_w"], layer["ff_ln_b"],
                     layer["w1"], layer["b1"], layer["w2"], layer["b2"],
                     params["norm_w"], params["norm_b"])
        in_specs = [x_spec] + [_const_spec(a.shape) for a in in_arrays[1:]]
        x = pl.pallas_call(
            kern,
            out_shape=out_shape,
            grid=(B, nq),
            in_specs=in_specs,
            out_specs=out_spec,
            compiler_params=cp,
        )(*in_arrays)

    if not layers:  # degenerate depth == 0: just the trailing LayerNorm
        x = pl.pallas_call(
            final_ln_kernel,
            out_shape=out_shape,
            grid=(B,),
            in_specs=[pl.BlockSpec((None, N, D), lambda b: (b, 0, 0)),
                      pl.BlockSpec(params["norm_w"].shape, lambda b: (0, 0)),
                      pl.BlockSpec(params["norm_b"].shape, lambda b: (0, 0))],
            out_specs=pl.BlockSpec((None, N, D), lambda b: (b, 0, 0)),
            compiler_params=pltpu.CompilerParams(dimension_semantics=("parallel",)),
        )(x, params["norm_w"], params["norm_b"])
    return x


# ---------------------------------------------------------------------------
# deterministic parameter init (shapes dictated by the PyTorch __init__)
# ---------------------------------------------------------------------------
def init_params(key, dim, depth, heads, dim_head, mlp_dim):
    inner = heads * dim_head
    layers = []
    for _ in range(depth):
        key, k1, k2, k3, k4, k5, k6 = jax.random.split(key, 7)
        layers.append(dict(
            attn_ln_w=jnp.ones((1, dim), jnp.float32),
            attn_ln_b=jnp.zeros((1, dim), jnp.float32),
            wqkv=(jax.random.normal(k1, (dim, 3 * inner)) * 0.02).astype(jnp.float32),
            wout=(jax.random.normal(k2, (inner, dim)) * 0.02).astype(jnp.float32),
            ff_ln_w=jnp.ones((1, dim), jnp.float32),
            ff_ln_b=jnp.zeros((1, dim), jnp.float32),
            w1=(jax.random.normal(k3, (dim, mlp_dim)) * 0.02).astype(jnp.float32),
            b1=(jax.random.normal(k4, (1, mlp_dim)) * 0.02).astype(jnp.float32),
            w2=(jax.random.normal(k5, (mlp_dim, dim)) * 0.02).astype(jnp.float32),
            b2=(jax.random.normal(k6, (1, dim)) * 0.02).astype(jnp.float32),
        ))
    return dict(layers=layers,
                norm_w=jnp.ones((1, dim), jnp.float32),
                norm_b=jnp.zeros((1, dim), jnp.float32))


# ---------------------------------------------------------------------------
# pure-JAX reference (mirrors the PyTorch forward exactly, f32 everywhere)
# ---------------------------------------------------------------------------
def transformer_ref(x, params, *, heads, dim_head):
    def ln(t, w, b):
        mu = jnp.mean(t, -1, keepdims=True)
        var = jnp.mean(jnp.square(t - mu), -1, keepdims=True)
        return (t - mu) / jnp.sqrt(var + EPS) * w + b

    B, N, D = x.shape
    for layer in params["layers"]:
        xn = ln(x, layer["attn_ln_w"][0], layer["attn_ln_b"][0])
        qkv = xn @ layer["wqkv"]
        q, k, v = jnp.split(qkv, 3, axis=-1)

        def to_heads(t):
            return t.reshape(B, N, heads, dim_head).transpose(0, 2, 1, 3)
        q, k, v = map(to_heads, (q, k, v))
        s = jnp.einsum("bhnd,bhmd->bhnm", q, k) * (dim_head ** -0.5)
        p = jax.nn.softmax(s, axis=-1)
        a = jnp.einsum("bhnm,bhmd->bhnd", p, v).transpose(0, 2, 1, 3).reshape(B, N, -1)
        x = a @ layer["wout"] + x

        xn = ln(x, layer["ff_ln_w"][0], layer["ff_ln_b"][0])
        h = jax.nn.gelu(xn @ layer["w1"] + layer["b1"][0], approximate=False)
        x = h @ layer["w2"] + layer["b2"][0] + x
    return ln(x, params["norm_w"][0], params["norm_b"][0])


# ---------------------------------------------------------------------------
if __name__ == "__main__":
    def run_case(B, N, dim, depth, heads, dim_head, mlp_dim):
        key = jax.random.PRNGKey(0)
        key, xk, pk = jax.random.split(key, 3)
        x = jax.random.normal(xk, (B, N, dim), dtype=jnp.float32)
        params = init_params(pk, dim, depth, heads, dim_head, mlp_dim)
        prepped = prepare_params(params, heads=heads, dim_head=dim_head)

        out = transformer_forward(x, prepped, heads=heads, dim_head=dim_head)
        out = jax.block_until_ready(out)

        ref = transformer_ref(x, params, heads=heads, dim_head=dim_head)
        assert out.shape == (B, N, dim)
        err = jnp.max(jnp.abs(out - ref))
        # bf16 matmul operands with f32 accumulation: tolerance loosened vs pure-f32
        assert jnp.allclose(out, ref, atol=1e-2, rtol=1e-2), f"max abs err {err}"

    # small case: single query tile per batch element (grid = (2, 1))
    run_case(B=2, N=8, dim=32, depth=2, heads=2, dim_head=16, mlp_dim=64)
    # larger case exercising the query-tiled path (grid = (2, 2), TQ = 128)
    run_case(B=2, N=256, dim=64, depth=2, heads=4, dim_head=16, mlp_dim=128)

    print("KERNEL_OK")
</pallas_src>

<mosaic_0001>
module attributes {stable_mosaic.version = 11 : i64} {
  func.func @layer_kernel(%arg0: i32, %arg1: i32, %arg2: memref<1x8x32xf32, #tpu.memory_space<vmem>>, %arg3: memref<1x32xf32, #tpu.memory_space<vmem>>, %arg4: memref<1x32xf32, #tpu.memory_space<vmem>>, %arg5: memref<32x96xbf16, #tpu.memory_space<vmem>>, %arg6: memref<32x32xbf16, #tpu.memory_space<vmem>>, %arg7: memref<1x32xf32, #tpu.memory_space<vmem>>, %arg8: memref<1x32xf32, #tpu.memory_space<vmem>>, %arg9: memref<32x64xbf16, #tpu.memory_space<vmem>>, %arg10: memref<1x64xf32, #tpu.memory_space<vmem>>, %arg11: memref<64x32xbf16, #tpu.memory_space<vmem>>, %arg12: memref<1x32xf32, #tpu.memory_space<vmem>>, %arg13: memref<1x32xf32, #tpu.memory_space<vmem>>, %arg14: memref<1x32xf32, #tpu.memory_space<vmem>>, %arg15: memref<1x8x32xf32, #tpu.memory_space<vmem>>) attributes {dimension_semantics = [#tpu.dimension_semantics<parallel>, #tpu.dimension_semantics<parallel>], iteration_bounds = array<i64: 2, 1>, scalar_prefetch = 0 : i64, scratch_operands = 0 : i64, tpu.core_type = #tpu.core_type<tc>, window_params = [{transform_indices = @transform_0, window_bounds = array<i64: 1, 8, 32>}, {pipeline_mode = #tpu.pipeline_mode<synchronous>, transform_indices = @transform_1, window_bounds = array<i64: 1, 32>}, {pipeline_mode = #tpu.pipeline_mode<synchronous>, transform_indices = @transform_2, window_bounds = array<i64: 1, 32>}, {pipeline_mode = #tpu.pipeline_mode<synchronous>, transform_indices = @transform_3, window_bounds = array<i64: 32, 96>}, {pipeline_mode = #tpu.pipeline_mode<synchronous>, transform_indices = @transform_4, window_bounds = array<i64: 32, 32>}, {pipeline_mode = #tpu.pipeline_mode<synchronous>, transform_indices = @transform_5, window_bounds = array<i64: 1, 32>}, {pipeline_mode = #tpu.pipeline_mode<synchronous>, transform_indices = @transform_6, window_bounds = array<i64: 1, 32>}, {pipeline_mode = #tpu.pipeline_mode<synchronous>, transform_indices = @transform_7, window_bounds = array<i64: 32, 64>}, {pipeline_mode = #tpu.pipeline_mode<synchronous>, transform_indices = @transform_8, window_bounds = array<i64: 1, 64>}, {pipeline_mode = #tpu.pipeline_mode<synchronous>, transform_indices = @transform_9, window_bounds = array<i64: 64, 32>}, {pipeline_mode = #tpu.pipeline_mode<synchronous>, transform_indices = @transform_10, window_bounds = array<i64: 1, 32>}, {pipeline_mode = #tpu.pipeline_mode<synchronous>, transform_indices = @transform_11, window_bounds = array<i64: 1, 32>}, {pipeline_mode = #tpu.pipeline_mode<synchronous>, transform_indices = @transform_12, window_bounds = array<i64: 1, 32>}, {transform_indices = @transform_13, window_bounds = array<i64: 1, 8, 32>}]} {
    %c0 = arith.constant 0 : index
    %c0_0 = arith.constant 0 : index
    %c0_1 = arith.constant 0 : index
    %0 = vector.load %arg2[%c0, %c0_0, %c0_1] : memref<1x8x32xf32, #tpu.memory_space<vmem>>, vector<1x8x32xf32>
    %1 = vector.shape_cast %0 : vector<1x8x32xf32> to vector<8x32xf32>
    %c0_2 = arith.constant 0 : index
    %c0_3 = arith.constant 0 : index
    %2 = vector.load %arg3[%c0_2, %c0_3] : memref<1x32xf32, #tpu.memory_space<vmem>>, vector<1x32xf32>
    %c0_4 = arith.constant 0 : index
    %c0_5 = arith.constant 0 : index
    %3 = vector.load %arg4[%c0_4, %c0_5] : memref<1x32xf32, #tpu.memory_space<vmem>>, vector<1x32xf32>
    %cst = arith.constant dense<0.000000e+00> : vector<8xf32>
    %4 = vector.multi_reduction <add>, %1, %cst [1] : vector<8x32xf32> to vector<8xf32>
    %5 = vector.shape_cast %4 : vector<8xf32> to vector<8x1xf32>
    %cst_6 = arith.constant 3.200000e+01 : f32
    %6 = vector.broadcast %cst_6 : f32 to vector<8x1xf32>
    %7 = arith.divf %5, %6 : vector<8x1xf32>
    %8 = vector.broadcast %7 : vector<8x1xf32> to vector<8x32xf32>
    %9 = arith.subf %1, %8 : vector<8x32xf32>
    %10 = arith.mulf %9, %9 : vector<8x32xf32>
    %cst_7 = arith.constant dense<0.000000e+00> : vector<8xf32>
    %11 = vector.multi_reduction <add>, %10, %cst_7 [1] : vector<8x32xf32> to vector<8xf32>
    %12 = vector.shape_cast %11 : vector<8xf32> to vector<8x1xf32>
    %cst_8 = arith.constant 3.200000e+01 : f32
    %13 = vector.broadcast %cst_8 : f32 to vector<8x1xf32>
    %14 = arith.divf %12, %13 : vector<8x1xf32>
    %15 = vector.broadcast %7 : vector<8x1xf32> to vector<8x32xf32>
    %16 = arith.subf %1, %15 : vector<8x32xf32>
    %cst_9 = arith.constant 9.99999974E-6 : f32
    %17 = vector.broadcast %cst_9 : f32 to vector<8x1xf32>
    %18 = arith.addf %14, %17 : vector<8x1xf32>
    %19 = math.rsqrt %18 : vector<8x1xf32>
    %20 = vector.broadcast %19 : vector<8x1xf32> to vector<8x32xf32>
    %21 = arith.mulf %16, %20 : vector<8x32xf32>
    %22 = vector.broadcast %2 : vector<1x32xf32> to vector<8x32xf32>
    %23 = arith.mulf %21, %22 : vector<8x32xf32>
    %24 = vector.broadcast %3 : vector<1x32xf32> to vector<8x32xf32>
    %25 = arith.addf %23, %24 : vector<8x32xf32>
    %26 = arith.truncf %25 : vector<8x32xf32> to vector<8x32xbf16>
    %c0_10 = arith.constant 0 : index
    %c0_11 = arith.constant 0 : index
    %27 = vector.load %arg5[%c0_10, %c0_11] : memref<32x96xbf16, #tpu.memory_space<vmem>>, vector<32x96xbf16>
    %cst_12 = arith.constant dense<0.000000e+00> : vector<8x96xf32>
    %28 = tpu.matmul %26, %27, %cst_12 {dimension_numbers = #tpu.dot_dimension_numbers<[1], [0], [0], [1], [0, 0, 1, 1], [], []>} : vector<8x32xbf16>, vector<32x96xbf16>, vector<8x96xf32> -> vector<8x96xf32>
    %29 = vector.extract_strided_slice %28 {offsets = [0, 0], sizes = [8, 32], strides = [1, 1]} : vector<8x96xf32> to vector<8x32xf32>
    %30 = vector.extract_strided_slice %28 {offsets = [0, 32], sizes = [8, 32], strides = [1, 1]} : vector<8x96xf32> to vector<8x32xf32>
    %31 = vector.extract_strided_slice %28 {offsets = [0, 64], sizes = [8, 32], strides = [1, 1]} : vector<8x96xf32> to vector<8x32xf32>
    %32 = arith.truncf %29 : vector<8x32xf32> to vector<8x32xbf16>
    %33 = arith.truncf %30 : vector<8x32xf32> to vector<8x32xbf16>
    %34 = arith.truncf %31 : vector<8x32xf32> to vector<8x32xbf16>
    %35 = vector.extract_strided_slice %32 {offsets = [0, 0], sizes = [8, 16], strides = [1, 1]} : vector<8x32xbf16> to vector<8x16xbf16>
    %36 = vector.extract_strided_slice %33 {offsets = [0, 0], sizes = [8, 16], strides = [1, 1]} : vector<8x32xbf16> to vector<8x16xbf16>
    %cst_13 = arith.constant dense<0.000000e+00> : vector<8x8xf32>
    %37 = tpu.matmul %35, %36, %cst_13 {dimension_numbers = #tpu.dot_dimension_numbers<[1], [1], [0], [0], [0, 0, 1, 0], [], []>} : vector<8x16xbf16>, vector<8x16xbf16>, vector<8x8xf32> -> vector<8x8xf32>
    %cst_14 = arith.constant dense<0xFF800000> : vector<8xf32>
    %38 = vector.multi_reduction <maximumf>, %37, %cst_14 [1] : vector<8x8xf32> to vector<8xf32>
    %39 = vector.shape_cast %38 : vector<8xf32> to vector<8x1xf32>
    %40 = vector.broadcast %39 : vector<8x1xf32> to vector<8x8xf32>
    %41 = arith.subf %37, %40 : vector<8x8xf32>
    %42 = math.exp %41 : vector<8x8xf32>
    %cst_15 = arith.constant dense<0.000000e+00> : vector<8xf32>
    %43 = vector.multi_reduction <add>, %42, %cst_15 [1] : vector<8x8xf32> to vector<8xf32>
    %44 = vector.shape_cast %43 : vector<8xf32> to vector<8x1xf32>
    %45 = tpu.reciprocal %44 {approx = true} : vector<8x1xf32> -> vector<8x1xf32>
    %46 = vector.broadcast %45 : vector<8x1xf32> to vector<8x8xf32>
    %47 = arith.mulf %42, %46 : vector<8x8xf32>
    %48 = arith.truncf %47 : vector<8x8xf32> to vector<8x8xbf16>
    %49 = vector.extract_strided_slice %34 {offsets = [0, 0], sizes = [8, 16], strides = [1, 1]} : vector<8x32xbf16> to vector<8x16xbf16>
    %cst_16 = arith.constant dense<0.000000e+00> : vector<8x16xf32>
    %50 = tpu.matmul %48, %49, %cst_16 {dimension_numbers = #tpu.dot_dimension_numbers<[1], [0], [0], [1], [0, 0, 1, 1], [], []>} : vector<8x8xbf16>, vector<8x16xbf16>, vector<8x16xf32> -> vector<8x16xf32>
    %51 = vector.extract_strided_slice %32 {offsets = [0, 16], sizes = [8, 16], strides = [1, 1]} : vector<8x32xbf16> to vector<8x16xbf16>
    %52 = vector.extract_strided_slice %33 {offsets = [0, 16], sizes = [8, 16], strides = [1, 1]} : vector<8x32xbf16> to vector<8x16xbf16>
    %cst_17 = arith.constant dense<0.000000e+00> : vector<8x8xf32>
    %53 = tpu.matmul %51, %52, %cst_17 {dimension_numbers = #tpu.dot_dimension_numbers<[1], [1], [0], [0], [0, 0, 1, 0], [], []>} : vector<8x16xbf16>, vector<8x16xbf16>, vector<8x8xf32> -> vector<8x8xf32>
    %cst_18 = arith.constant dense<0xFF800000> : vector<8xf32>
    %54 = vector.multi_reduction <maximumf>, %53, %cst_18 [1] : vector<8x8xf32> to vector<8xf32>
    %55 = vector.shape_cast %54 : vector<8xf32> to vector<8x1xf32>
    %56 = vector.broadcast %55 : vector<8x1xf32> to vector<8x8xf32>
    %57 = arith.subf %53, %56 : vector<8x8xf32>
    %58 = math.exp %57 : vector<8x8xf32>
    %cst_19 = arith.constant dense<0.000000e+00> : vector<8xf32>
    %59 = vector.multi_reduction <add>, %58, %cst_19 [1] : vector<8x8xf32> to vector<8xf32>
    %60 = vector.shape_cast %59 : vector<8xf32> to vector<8x1xf32>
    %61 = tpu.reciprocal %60 {approx = true} : vector<8x1xf32> -> vector<8x1xf32>
    %62 = vector.broadcast %61 : vector<8x1xf32> to vector<8x8xf32>
    %63 = arith.mulf %58, %62 : vector<8x8xf32>
    %64 = arith.truncf %63 : vector<8x8xf32> to vector<8x8xbf16>
    %65 = vector.extract_strided_slice %34 {offsets = [0, 16], sizes = [8, 16], strides = [1, 1]} : vector<8x32xbf16> to vector<8x16xbf16>
    %cst_20 = arith.constant dense<0.000000e+00> : vector<8x16xf32>
    %66 = tpu.matmul %64, %65, %cst_20 {dimension_numbers = #tpu.dot_dimension_numbers<[1], [0], [0], [1], [0, 0, 1, 1], [], []>} : vector<8x8xbf16>, vector<8x16xbf16>, vector<8x16xf32> -> vector<8x16xf32>
    %67 = tpu.concatenate %50, %66 in 1 : vector<8x16xf32>, vector<8x16xf32> -> vector<8x32xf32>
    %68 = arith.truncf %67 : vector<8x32xf32> to vector<8x32xbf16>
    %c0_21 = arith.constant 0 : index
    %c0_22 = arith.constant 0 : index
    %69 = vector.load %arg6[%c0_21, %c0_22] : memref<32x32xbf16, #tpu.memory_space<vmem>>, vector<32x32xbf16>
    %cst_23 = arith.constant dense<0.000000e+00> : vector<8x32xf32>
    %70 = tpu.matmul %68, %69, %cst_23 {dimension_numbers = #tpu.dot_dimension_numbers<[1], [0], [0], [1], [0, 0, 1, 1], [], []>} : vector<8x32xbf16>, vector<32x32xbf16>, vector<8x32xf32> -> vector<8x32xf32>
    %71 = arith.addf %70, %1 : vector<8x32xf32>
    %c0_24 = arith.constant 0 : index
    %c0_25 = arith.constant 0 : index
    %72 = vector.load %arg7[%c0_24, %c0_25] : memref<1x32xf32, #tpu.memory_space<vmem>>, vector<1x32xf32>
    %c0_26 = arith.constant 0 : index
    %c0_27 = arith.constant 0 : index
    %73 = vector.load %arg8[%c0_26, %c0_27] : memref<1x32xf32, #tpu.memory_space<vmem>>, vector<1x32xf32>
    %cst_28 = arith.constant dense<0.000000e+00> : vector<8xf32>
    %74 = vector.multi_reduction <add>, %71, %cst_28 [1] : vector<8x32xf32> to vector<8xf32>
    %75 = vector.shape_cast %74 : vector<8xf32> to vector<8x1xf32>
    %cst_29 = arith.constant 3.200000e+01 : f32
    %76 = vector.broadcast %cst_29 : f32 to vector<8x1xf32>
    %77 = arith.divf %75, %76 : vector<8x1xf32>
    %78 = vector.broadcast %77 : vector<8x1xf32> to vector<8x32xf32>
    %79 = arith.subf %71, %78 : vector<8x32xf32>
    %80 = arith.mulf %79, %79 : vector<8x32xf32>
    %cst_30 = arith.constant dense<0.000000e+00> : vector<8xf32>
    %81 = vector.multi_reduction <add>, %80, %cst_30 [1] : vector<8x32xf32> to vector<8xf32>
    %82 = vector.shape_cast %81 : vector<8xf32> to vector<8x1xf32>
    %cst_31 = arith.constant 3.200000e+01 : f32
    %83 = vector.broadcast %cst_31 : f32 to vector<8x1xf32>
    %84 = arith.divf %82, %83 : vector<8x1xf32>
    %85 = vector.broadcast %77 : vector<8x1xf32> to vector<8x32xf32>
    %86 = arith.subf %71, %85 : vector<8x32xf32>
    %cst_32 = arith.constant 9.99999974E-6 : f32
    %87 = vector.broadcast %cst_32 : f32 to vector<8x1xf32>
    %88 = arith.addf %84, %87 : vector<8x1xf32>
    %89 = math.rsqrt %88 : vector<8x1xf32>
    %90 = vector.broadcast %89 : vector<8x1xf32> to vector<8x32xf32>
    %91 = arith.mulf %86, %90 : vector<8x32xf32>
    %92 = vector.broadcast %72 : vector<1x32xf32> to vector<8x32xf32>
    %93 = arith.mulf %91, %92 : vector<8x32xf32>
    %94 = vector.broadcast %73 : vector<1x32xf32> to vector<8x32xf32>
    %95 = arith.addf %93, %94 : vector<8x32xf32>
    %96 = arith.truncf %95 : vector<8x32xf32> to vector<8x32xbf16>
    %c0_33 = arith.constant 0 : index
    %c0_34 = arith.constant 0 : index
    %97 = vector.load %arg9[%c0_33, %c0_34] : memref<32x64xbf16, #tpu.memory_space<vmem>>, vector<32x64xbf16>
    %cst_35 = arith.constant dense<0.000000e+00> : vector<8x64xf32>
    %98 = tpu.matmul %96, %97, %cst_35 {dimension_numbers = #tpu.dot_dimension_numbers<[1], [0], [0], [1], [0, 0, 1, 1], [], []>} : vector<8x32xbf16>, vector<32x64xbf16>, vector<8x64xf32> -> vector<8x64xf32>
    %c0_36 = arith.constant 0 : index
    %c0_37 = arith.constant 0 : index
    %99 = vector.load %arg10[%c0_36, %c0_37] : memref<1x64xf32, #tpu.memory_space<vmem>>, vector<1x64xf32>
    %100 = vector.broadcast %99 : vector<1x64xf32> to vector<8x64xf32>
    %101 = arith.addf %98, %100 : vector<8x64xf32>
    %cst_38 = arith.constant 5.000000e-01 : f32
    %102 = vector.broadcast %cst_38 : f32 to vector<8x64xf32>
    %103 = arith.mulf %102, %101 : vector<8x64xf32>
    %cst_39 = arith.constant 0.707106769 : f32
    %104 = vector.broadcast %cst_39 : f32 to vector<8x64xf32>
    %105 = arith.mulf %101, %104 : vector<8x64xf32>
    %106 = math.erf %105 : vector<8x64xf32>
    %cst_40 = arith.constant 1.000000e+00 : f32
    %107 = vector.broadcast %cst_40 : f32 to vector<8x64xf32>
    %108 = arith.addf %107, %106 : vector<8x64xf32>
    %109 = arith.mulf %103, %108 : vector<8x64xf32>
    %110 = arith.truncf %109 : vector<8x64xf32> to vector<8x64xbf16>
    %c0_41 = arith.constant 0 : index
    %c0_42 = arith.constant 0 : index
    %111 = vector.load %arg11[%c0_41, %c0_42] : memref<64x32xbf16, #tpu.memory_space<vmem>>, vector<64x32xbf16>
    %cst_43 = arith.constant dense<0.000000e+00> : vector<8x32xf32>
    %112 = tpu.matmul %110, %111, %cst_43 {dimension_numbers = #tpu.dot_dimension_numbers<[1], [0], [0], [1], [0, 0, 1, 1], [], []>} : vector<8x64xbf16>, vector<64x32xbf16>, vector<8x32xf32> -> vector<8x32xf32>
    %c0_44 = arith.constant 0 : index
    %c0_45 = arith.constant 0 : index
    %113 = vector.load %arg12[%c0_44, %c0_45] : memref<1x32xf32, #tpu.memory_space<vmem>>, vector<1x32xf32>
    %114 = vector.broadcast %113 : vector<1x32xf32> to vector<8x32xf32>
    %115 = arith.addf %112, %114 : vector<8x32xf32>
    %116 = arith.addf %115, %71 : vector<8x32xf32>
    %c0_46 = arith.constant 0 : index
    %c0_47 = arith.constant 0 : index
    %c0_48 = arith.constant 0 : index
    %117 = vector.load %arg15[%c0_46, %c0_47, %c0_48] : memref<1x8x32xf32, #tpu.memory_space<vmem>>, vector<1x8x32xf32>
    %118 = vector.shape_cast %117 : vector<1x8x32xf32> to vector<8x32xf32>
    %119 = vector.shape_cast %116 : vector<8x32xf32> to vector<1x8x32xf32>
    tpu.vector_store %arg15[%c0_46, %c0_47, %c0_48], %119 {strides = array<i32>} : memref<1x8x32xf32, #tpu.memory_space<vmem>>, vector<1x8x32xf32>,
    return
  }
  func.func @transform_0(%arg0: i32, %arg1: i32) -> (i32, i32, i32) {
    %c0_i32 = arith.constant 0 : i32
    %c0_i32_0 = arith.constant 0 : i32
    %c0_i32_1 = arith.constant 0 : i32
    return %arg0, %c0_i32, %c0_i32_0 : i32, i32, i32
  }
  func.func @transform_1(%arg0: i32, %arg1: i32) -> (i32, i32) {
    %c0_i32 = arith.constant 0 : i32
    %c0_i32_0 = arith.constant 0 : i32
    %c0_i32_1 = arith.constant 0 : i32
    return %c0_i32, %c0_i32_0 : i32, i32
  }
  func.func @transform_2(%arg0: i32, %arg1: i32) -> (i32, i32) {
    %c0_i32 = arith.constant 0 : i32
    %c0_i32_0 = arith.constant 0 : i32
    %c0_i32_1 = arith.constant 0 : i32
    return %c0_i32, %c0_i32_0 : i32, i32
  }
  func.func @transform_3(%arg0: i32, %arg1: i32) -> (i32, i32) {
    %c0_i32 = arith.constant 0 : i32
    %c0_i32_0 = arith.constant 0 : i32
    %c0_i32_1 = arith.constant 0 : i32
    return %c0_i32, %c0_i32_0 : i32, i32
  }
  func.func @transform_4(%arg0: i32, %arg1: i32) -> (i32, i32) {
    %c0_i32 = arith.constant 0 : i32
    %c0_i32_0 = arith.constant 0 : i32
    %c0_i32_1 = arith.constant 0 : i32
    return %c0_i32, %c0_i32_0 : i32, i32
  }
  func.func @transform_5(%arg0: i32, %arg1: i32) -> (i32, i32) {
    %c0_i32 = arith.constant 0 : i32
    %c0_i32_0 = arith.constant 0 : i32
    %c0_i32_1 = arith.constant 0 : i32
    return %c0_i32, %c0_i32_0 : i32, i32
  }
  func.func @transform_6(%arg0: i32, %arg1: i32) -> (i32, i32) {
    %c0_i32 = arith.constant 0 : i32
    %c0_i32_0 = arith.constant 0 : i32
    %c0_i32_1 = arith.constant 0 : i32
    return %c0_i32, %c0_i32_0 : i32, i32
  }
  func.func @transform_7(%arg0: i32, %arg1: i32) -> (i32, i32) {
    %c0_i32 = arith.constant 0 : i32
    %c0_i32_0 = arith.constant 0 : i32
    %c0_i32_1 = arith.constant 0 : i32
    return %c0_i32, %c0_i32_0 : i32, i32
  }
  func.func @transform_8(%arg0: i32, %arg1: i32) -> (i32, i32) {
    %c0_i32 = arith.constant 0 : i32
    %c0_i32_0 = arith.constant 0 : i32
    %c0_i32_1 = arith.constant 0 : i32
    return %c0_i32, %c0_i32_0 : i32, i32
  }
  func.func @transform_9(%arg0: i32, %arg1: i32) -> (i32, i32) {
    %c0_i32 = arith.constant 0 : i32
    %c0_i32_0 = arith.constant 0 : i32
    %c0_i32_1 = arith.constant 0 : i32
    return %c0_i32, %c0_i32_0 : i32, i32
  }
  func.func @transform_10(%arg0: i32, %arg1: i32) -> (i32, i32) {
    %c0_i32 = arith.constant 0 : i32
    %c0_i32_0 = arith.constant 0 : i32
    %c0_i32_1 = arith.constant 0 : i32
    return %c0_i32, %c0_i32_0 : i32, i32
  }
  func.func @transform_11(%arg0: i32, %arg1: i32) -> (i32, i32) {
    %c0_i32 = arith.constant 0 : i32
    %c0_i32_0 = arith.constant 0 : i32
    %c0_i32_1 = arith.constant 0 : i32
    return %c0_i32, %c0_i32_0 : i32, i32
  }
  func.func @transform_12(%arg0: i32, %arg1: i32) -> (i32, i32) {
    %c0_i32 = arith.constant 0 : i32
    %c0_i32_0 = arith.constant 0 : i32
    %c0_i32_1 = arith.constant 0 : i32
    return %c0_i32, %c0_i32_0 : i32, i32
  }
  func.func @transform_13(%arg0: i32, %arg1: i32) -> (i32, i32, i32) {
    %c0_i32 = arith.constant 0 : i32
    %c0_i32_0 = arith.constant 0 : i32
    return %arg0, %arg1, %c0_i32 : i32, i32, i32
  }
}

</mosaic_0001>

<llo_original>
// kernel: tpu_custom_call.1
$region0: #{tpu_custom_call.1}
  #allocation0 [shape = 'u32[]', space=smem, size = 0x4, offset = 0x4, fixed_abs, tag = 'smem constant byte address 0x4 - core index']
  #allocation1 [shape = 'u32[72,128]{1,0:T(1,128)}', space=vmem, size = 0x9000, scoped, tag = 'internal scratch']
  %s0 = inlined_call_operand.vmem [shape: f32[2,8,32], index: 0, kind: input, shape index: {}]
  %s1 = inlined_call_operand.hbm [shape: f32[1,32], index: 1, kind: input, shape index: {}]
  %s2 = inlined_call_operand.vmem [shape: f32[1,32], index: 2, kind: input, shape index: {}]
  %s3 = inlined_call_operand.vmem [shape: bf16[32,96], index: 3, kind: input, shape index: {}]
  %s4 = inlined_call_operand.vmem [shape: bf16[32,32], index: 4, kind: input, shape index: {}]
  %s5 = inlined_call_operand.vmem [shape: f32[1,32], index: 5, kind: input, shape index: {}]
  %s6 = inlined_call_operand.vmem [shape: f32[1,32], index: 6, kind: input, shape index: {}]
  %s7 = inlined_call_operand.hbm [shape: bf16[32,64], index: 7, kind: input, shape index: {}]
  %s8 = inlined_call_operand.vmem [shape: f32[1,64], index: 8, kind: input, shape index: {}]
  %s9 = inlined_call_operand.vmem [shape: bf16[64,32], index: 9, kind: input, shape index: {}]
  %s10 = inlined_call_operand.vmem [shape: f32[1,32], index: 10, kind: input, shape index: {}]
  %s11 = inlined_call_operand.vmem [shape: f32[1,32], index: 11, kind: input, shape index: {}]
  %s12 = inlined_call_operand.vmem [shape: f32[1,32], index: 12, kind: input, shape index: {}]
  %s13 = inlined_call_operand.hbm [shape: f32[2,8,32], index: 13, kind: output, shape index: {}]
  %s14 = sld [smem:[#allocation0]]
  $region93: #{tpu_custom_call.1} parent=0
    _
  %s16 = ssub.s32 1, %s14
  %s17 = scalar_select 0, %s16, %s14
  $region1: #{tpu_custom_call.1} parent=0
    #allocation2 [shape = 'u8[512]{0}', space=vmem, size = 0x400, scoped, tag = 'input window, operand 1, single buffered']
    #allocation3 [shape = 's32[2]{0}', space=sflag, size = 0x8, scoped, tag = 'scoped memory for tpu_custom_call.1']
    #allocation4 [shape = 's32[2]{0}', space=sflag, size = 0x8, scoped, tag = 'scoped memory for tpu_custom_call.1']
    #allocation5 [shape = 'u8[8192]{0}', space=vmem, size = 0x2000, scoped, tag = 'input window, operand 7, single buffered']
    #allocation6 [shape = 's32[1]{0}', space=sflag, size = 0x4, scoped, tag = 'scoped memory for tpu_custom_call.1']
    #allocation7 [shape = 'u8[8192]{0}', space=vmem, size = 0x2000, scoped, tag = 'output window, operand 0']
    %18 = vsyncpa [#allocation3], 0
    %19 = vsyncpa [#allocation6], 0
    %20 = vsyncpa [#allocation4], 0
    %s21 = scalar_lea.sflag [#allocation4], 1
    %22 = vsyncpa %s21, 0
    loop: start=0, step=1, limit=4
    $region2: #{tpu_custom_call.1} parent=1 // loop_pre_header
      _
    $region3: #{tpu_custom_call.1} parent=1 // loop_header
      %s24 = sphi 0, %s28
      %p25 = scmp.ge.s32.totalorder %s24, 4
      %s31 = sphi 0, %s43
      %s32 = sphi 0, %s39
      %s33 = sphi 0, %s31
      %s34 = sphi 0, %s32
      %s35 = sphi 0, %s33
      %s36 = sphi 0, %s34
      %s46 = sphi 0, %s48
      %s49 = sphi 0, %s46
      %s50 = sphi 0, %s49
      %s66 = sphi 0, %s50
      %s70 = sphi 0, %s70
      %s72 = sphi 0, %s70
      %s73 = sphi 0, %s72
      %s87 = sphi 0, %s73
      %s91 = sphi 0, %s91
      %s93 = sphi 0, %s91
      %s94 = sphi 0, %s93
      %s108 = sphi 0, %s94
      %s112 = sphi 0, %s112
      %s114 = sphi 0, %s112
      %s115 = sphi 0, %s114
      %s129 = sphi 0, %s115
      %s133 = sphi 0, %s133
      %s135 = sphi 0, %s133
      %s136 = sphi 0, %s135
      %s150 = sphi 0, %s136
      %s154 = sphi 0, %s154
      %s156 = sphi 0, %s154
      %s157 = sphi 0, %s156
      %s171 = sphi 0, %s157
      %s175 = sphi 0, %s175
      %s177 = sphi 0, %s175
      %s178 = sphi 0, %s177
      %s192 = sphi 0, %s178
      %s196 = sphi 0, %s196
      %s198 = sphi 0, %s196
      %s199 = sphi 0, %s198
      %s213 = sphi 0, %s199
      %s217 = sphi 0, %s217
      %s219 = sphi 0, %s217
      %s220 = sphi 0, %s219
      %s234 = sphi 0, %s220
      %s238 = sphi 0, %s238
      %s240 = sphi 0, %s238
      %s241 = sphi 0, %s240
      %s255 = sphi 0, %s241
      %s259 = sphi 0, %s259
      %s261 = sphi 0, %s259
      %s262 = sphi 0, %s261
      %s276 = sphi 0, %s262
      %s280 = sphi 0, %s280
      %s282 = sphi 0, %s280
      %s283 = sphi 0, %s282
      %s297 = sphi 0, %s283
      %s301 = sphi 0, %s301
      %s303 = sphi 0, %s301
      %s304 = sphi 0, %s303
      %s318 = sphi 0, %s304
      %s326 = sphi 0, %s328
      %s329 = sphi 0, %s326
      %s330 = sphi 0, %s329
      %s346 = sphi 0, %s330
    $region4: #{tpu_custom_call.1} parent=1 // loop_header_branch
      %27 = sbr.rel (%p25) target = $region8
    $region5: #{tpu_custom_call.1} parent=1 // loop_body
      %s29 = ssub.s32 %s24, 1
      %s30 = ssub.s32 %s24, 2
      %s37 = sadd.s32 1, %s32
      %p38 = scmp.ge.s32.totalorder %s37, 1
      %s39 = scalar_select %p38, 0, %s37
      %s40 = sadd.s32 1, %s31
      %s41 = scalar_select %p38, %s40, %s31
      %p42 = scmp.ge.s32.totalorder %s41, 2
      %s43 = scalar_select %p42, 0, %s41
      %s44 = ssub.s32 %s31, %s43
      %p45 = scmp.eq.s32.totalorder %s44, 0
      %s47 = sadd.s32 %s46, 1
      %s48 = scalar_select %p45, %s46, %s47
      %p51 = pneg %p45
      %p52 = scmp.eq.s32.totalorder %s24, 1
      %p53 = por %p51, %p52
      %p54 = scmp.ne.s32.totalorder %s46, %s49
      %p55 = scmp.eq.s32.totalorder %s24, 0
      %p56 = por %p54, %p55
      %p57 = scmp.ne.s32.totalorder %s46, %s49
      %p58 = scmp.eq.s32.totalorder %s29, 1
      %p59 = por %p57, %p58
      %p60 = scmp.ne.s32.totalorder %s49, %s50
      %p61 = scmp.eq.s32.totalorder %s29, 0
      %p62 = por %p60, %p61
      %p63 = scmp.ne.s32.totalorder %s49, %s50
      %p64 = scmp.eq.s32.totalorder %s30, 1
      %p65 = por %p63, %p64
      %p67 = scmp.ne.s32.totalorder %s50, %s66
      %p68 = scmp.eq.s32.totalorder %s30, 0
      %p69 = por %p67, %p68
      %s71 = sadd.s32 %s70, 1
      %p74 = scmp.eq.s32.totalorder %s24, 1
      %p75 = scmp.ne.s32.totalorder %s70, %s72
      %p76 = scmp.eq.s32.totalorder %s24, 0
      %p77 = por %p75, %p76
      %p78 = scmp.ne.s32.totalorder %s70, %s72
      %p79 = scmp.eq.s32.totalorder %s29, 1
      %p80 = por %p78, %p79
      %p81 = scmp.ne.s32.totalorder %s72, %s73
      %p82 = scmp.eq.s32.totalorder %s29, 0
      %p83 = por %p81, %p82
      %p84 = scmp.ne.s32.totalorder %s72, %s73
      %p85 = scmp.eq.s32.totalorder %s30, 1
      %p86 = por %p84, %p85
      %p88 = scmp.ne.s32.totalorder %s73, %s87
      %p89 = scmp.eq.s32.totalorder %s30, 0
      %p90 = por %p88, %p89
      %s92 = sadd.s32 %s91, 1
      %p95 = scmp.eq.s32.totalorder %s24, 1
      %p96 = scmp.ne.s32.totalorder %s91, %s93
      %p97 = scmp.eq.s32.totalorder %s24, 0
      %p98 = por %p96, %p97
      %p99 = scmp.ne.s32.totalorder %s91, %s93
      %p100 = scmp.eq.s32.totalorder %s29, 1
      %p101 = por %p99, %p100
      %p102 = scmp.ne.s32.totalorder %s93, %s94
      %p103 = scmp.eq.s32.totalorder %s29, 0
      %p104 = por %p102, %p103
      %p105 = scmp.ne.s32.totalorder %s93, %s94
      %p106 = scmp.eq.s32.totalorder %s30, 1
      %p107 = por %p105, %p106
      %p109 = scmp.ne.s32.totalorder %s94, %s108
      %p110 = scmp.eq.s32.totalorder %s30, 0
      %p111 = por %p109, %p110
      %s113 = sadd.s32 %s112, 1
      %p116 = scmp.eq.s32.totalorder %s24, 1
      %p117 = scmp.ne.s32.totalorder %s112, %s114
      %p118 = scmp.eq.s32.totalorder %s24, 0
      %p119 = por %p117, %p118
      %p120 = scmp.ne.s32.totalorder %s112, %s114
      %p121 = scmp.eq.s32.totalorder %s29, 1
      %p122 = por %p120, %p121
      %p123 = scmp.ne.s32.totalorder %s114, %s115
      %p124 = scmp.eq.s32.totalorder %s29, 0
      %p125 = por %p123, %p124
      %p126 = scmp.ne.s32.totalorder %s114, %s115
      %p127 = scmp.eq.s32.totalorder %s30, 1
      %p128 = por %p126, %p127
      %p130 = scmp.ne.s32.totalorder %s115, %s129
      %p131 = scmp.eq.s32.totalorder %s30, 0
      %p132 = por %p130, %p131
      %s134 = sadd.s32 %s133, 1
      %p137 = scmp.eq.s32.totalorder %s24, 1
      %p138 = scmp.ne.s32.totalorder %s133, %s135
      %p139 = scmp.eq.s32.totalorder %s24, 0
      %p140 = por %p138, %p139
      %p141 = scmp.ne.s32.totalorder %s133, %s135
      %p142 = scmp.eq.s32.totalorder %s29, 1
      %p143 = por %p141, %p142
      %p144 = scmp.ne.s32.totalorder %s135, %s136
      %p145 = scmp.eq.s32.totalorder %s29, 0
      %p146 = por %p144, %p145
      %p147 = scmp.ne.s32.totalorder %s135, %s136
      %p148 = scmp.eq.s32.totalorder %s30, 1
      %p149 = por %p147, %p148
      %p151 = scmp.ne.s32.totalorder %s136, %s150
      %p152 = scmp.eq.s32.totalorder %s30, 0
      %p153 = por %p151, %p152
      %s155 = sadd.s32 %s154, 1
      %p158 = scmp.eq.s32.totalorder %s24, 1
      %p159 = scmp.ne.s32.totalorder %s154, %s156
      %p160 = scmp.eq.s32.totalorder %s24, 0
      %p161 = por %p159, %p160
      %p162 = scmp.ne.s32.totalorder %s154, %s156
      %p163 = scmp.eq.s32.totalorder %s29, 1
      %p164 = por %p162, %p163
      %p165 = scmp.ne.s32.totalorder %s156, %s157
      %p166 = scmp.eq.s32.totalorder %s29, 0
      %p167 = por %p165, %p166
      %p168 = scmp.ne.s32.totalorder %s156, %s157
      %p169 = scmp.eq.s32.totalorder %s30, 1
      %p170 = por %p168, %p169
      %p172 = scmp.ne.s32.totalorder %s157, %s171
      %p173 = scmp.eq.s32.totalorder %s30, 0
      %p174 = por %p172, %p173
      %s176 = sadd.s32 %s175, 1
      %p179 = scmp.eq.s32.totalorder %s24, 1
      %p180 = scmp.ne.s32.totalorder %s175, %s177
      %p181 = scmp.eq.s32.totalorder %s24, 0
      %p182 = por %p180, %p181
      %p183 = scmp.ne.s32.totalorder %s175, %s177
      %p184 = scmp.eq.s32.totalorder %s29, 1
      %p185 = por %p183, %p184
      %p186 = scmp.ne.s32.totalorder %s177, %s178
      %p187 = scmp.eq.s32.totalorder %s29, 0
      %p188 = por %p186, %p187
      %p189 = scmp.ne.s32.totalorder %s177, %s178
      %p190 = scmp.eq.s32.totalorder %s30, 1
      %p191 = por %p189, %p190
      %p193 = scmp.ne.s32.totalorder %s178, %s192
      %p194 = scmp.eq.s32.totalorder %s30, 0
      %p195 = por %p193, %p194
      %s197 = sadd.s32 %s196, 1
      %p200 = scmp.eq.s32.totalorder %s24, 1
      %p201 = scmp.ne.s32.totalorder %s196, %s198
      %p202 = scmp.eq.s32.totalorder %s24, 0
      %p203 = por %p201, %p202
      %p204 = scmp.ne.s32.totalorder %s196, %s198
      %p205 = scmp.eq.s32.totalorder %s29, 1
      %p206 = por %p204, %p205
      %p207 = scmp.ne.s32.totalorder %s198, %s199
      %p208 = scmp.eq.s32.totalorder %s29, 0
      %p209 = por %p207, %p208
      %p210 = scmp.ne.s32.totalorder %s198, %s199
      %p211 = scmp.eq.s32.totalorder %s30, 1
      %p212 = por %p210, %p211
      %p214 = scmp.ne.s32.totalorder %s199, %s213
      %p215 = scmp.eq.s32.totalorder %s30, 0
      %p216 = por %p214, %p215
      %s218 = sadd.s32 %s217, 1
      %p221 = scmp.eq.s32.totalorder %s24, 1
      %p222 = scmp.ne.s32.totalorder %s217, %s219
      %p223 = scmp.eq.s32.totalorder %s24, 0
      %p224 = por %p222, %p223
      %p225 = scmp.ne.s32.totalorder %s217, %s219
      %p226 = scmp.eq.s32.totalorder %s29, 1
      %p227 = por %p225, %p226
      %p228 = scmp.ne.s32.totalorder %s219, %s220
      %p229 = scmp.eq.s32.totalorder %s29, 0
      %p230 = por %p228, %p229
      %p231 = scmp.ne.s32.totalorder %s219, %s220
      %p232 = scmp.eq.s32.totalorder %s30, 1
      %p233 = por %p231, %p232
      %p235 = scmp.ne.s32.totalorder %s220, %s234
      %p236 = scmp.eq.s32.totalorder %s30, 0
      %p237 = por %p235, %p236
      %s239 = sadd.s32 %s238, 1
      %p242 = scmp.eq.s32.totalorder %s24, 1
      %p243 = scmp.ne.s32.totalorder %s238, %s240
      %p244 = scmp.eq.s32.totalorder %s24, 0
      %p245 = por %p243, %p244
      %p246 = scmp.ne.s32.totalorder %s238, %s240
      %p247 = scmp.eq.s32.totalorder %s29, 1
      %p248 = por %p246, %p247
      %p249 = scmp.ne.s32.totalorder %s240, %s241
      %p250 = scmp.eq.s32.totalorder %s29, 0
      %p251 = por %p249, %p250
      %p252 = scmp.ne.s32.totalorder %s240, %s241
      %p253 = scmp.eq.s32.totalorder %s30, 1
      %p254 = por %p252, %p253
      %p256 = scmp.ne.s32.totalorder %s241, %s255
      %p257 = scmp.eq.s32.totalorder %s30, 0
      %p258 = por %p256, %p257
      %s260 = sadd.s32 %s259, 1
      %p263 = scmp.eq.s32.totalorder %s24, 1
      %p264 = scmp.ne.s32.totalorder %s259, %s261
      %p265 = scmp.eq.s32.totalorder %s24, 0
      %p266 = por %p264, %p265
      %p267 = scmp.ne.s32.totalorder %s259, %s261
      %p268 = scmp.eq.s32.totalorder %s29, 1
      %p269 = por %p267, %p268
      %p270 = scmp.ne.s32.totalorder %s261, %s262
      %p271 = scmp.eq.s32.totalorder %s29, 0
      %p272 = por %p270, %p271
      %p273 = scmp.ne.s32.totalorder %s261, %s262
      %p274 = scmp.eq.s32.totalorder %s30, 1
      %p275 = por %p273, %p274
      %p277 = scmp.ne.s32.totalorder %s262, %s276
      %p278 = scmp.eq.s32.totalorder %s30, 0
      %p279 = por %p277, %p278
      %s281 = sadd.s32 %s280, 1
      %p284 = scmp.eq.s32.totalorder %s24, 1
      %p285 = scmp.ne.s32.totalorder %s280, %s282
      %p286 = scmp.eq.s32.totalorder %s24, 0
      %p287 = por %p285, %p286
      %p288 = scmp.ne.s32.totalorder %s280, %s282
      %p289 = scmp.eq.s32.totalorder %s29, 1
      %p290 = por %p288, %p289
      %p291 = scmp.ne.s32.totalorder %s282, %s283
      %p292 = scmp.eq.s32.totalorder %s29, 0
      %p293 = por %p291, %p292
      %p294 = scmp.ne.s32.totalorder %s282, %s283
      %p295 = scmp.eq.s32.totalorder %s30, 1
      %p296 = por %p294, %p295
      %p298 = scmp.ne.s32.totalorder %s283, %s297
      %p299 = scmp.eq.s32.totalorder %s30, 0
      %p300 = por %p298, %p299
      %s302 = sadd.s32 %s301, 1
      %p305 = scmp.eq.s32.totalorder %s24, 1
      %p306 = scmp.ne.s32.totalorder %s301, %s303
      %p307 = scmp.eq.s32.totalorder %s24, 0
      %p308 = por %p306, %p307
      %p309 = scmp.ne.s32.totalorder %s301, %s303
      %p310 = scmp.eq.s32.totalorder %s29, 1
      %p311 = por %p309, %p310
      %p312 = scmp.ne.s32.totalorder %s303, %s304
      %p313 = scmp.eq.s32.totalorder %s29, 0
      %p314 = por %p312, %p313
      %p315 = scmp.ne.s32.totalorder %s303, %s304
      %p316 = scmp.eq.s32.totalorder %s30, 1
      %p317 = por %p315, %p316
      %p319 = scmp.ne.s32.totalorder %s304, %s318
      %p320 = scmp.eq.s32.totalorder %s30, 0
      %p321 = por %p319, %p320
      %s322 = ssub.s32 %s31, %s43
      %s323 = ssub.s32 %s32, %s39
      %s324 = sor.u32 %s322, %s323
      %p325 = scmp.eq.s32.totalorder %s324, 0
      %s327 = sadd.s32 %s326, 1
      %s328 = scalar_select %p325, %s326, %s327
      %p331 = pneg %p325
      %p332 = scmp.eq.s32.totalorder %s24, 1
      %p333 = por %p331, %p332
      %p334 = scmp.ne.s32.totalorder %s326, %s329
      %p335 = scmp.eq.s32.totalorder %s24, 0
      %p336 = por %p334, %p335
      %p337 = scmp.ne.s32.totalorder %s326, %s329
      %p338 = scmp.eq.s32.totalorder %s29, 1
      %p339 = por %p337, %p338
      %p340 = scmp.ne.s32.totalorder %s329, %s330
      %p341 = scmp.eq.s32.totalorder %s29, 0
      %p342 = por %p340, %p341
      %p343 = scmp.ne.s32.totalorder %s329, %s330
      %p344 = scmp.eq.s32.totalorder %s30, 1
      %p345 = por %p343, %p344
      %p347 = scmp.ne.s32.totalorder %s330, %s346
      %p348 = scmp.eq.s32.totalorder %s30, 0
      %p349 = por %p347, %p348
      %p350 = scmp.le.s32.totalorder 1, %s24
      %p351 = scmp.lt.s32.totalorder %s24, 3
      %p352 = pnand %p350, %p351
      %p353 = pneg %p352
      // Predicated region
      $region9: #{tpu_custom_call.1} parent=5 // pred_check
        _
      $region10: #{tpu_custom_call.1} parent=5 // pred_check_branch
        %355 = sbr.rel (%p352) target = $region12
      $region11: #{tpu_custom_call.1} parent=5 // pred_region
        %s356 = ssub.s32 %s24, 1
        // Predicated region
        $region13: #{tpu_custom_call.1} parent=11 // pred_check
          %p357 = pneg %p83
        $region14: #{tpu_custom_call.1} parent=11 // pred_check_branch
          %359 = sbr.rel (%p357) target = $region16
        $region15: #{tpu_custom_call.1} parent=11 // pred_region
          %361 = vsyncadd [#allocation3], 0
          %s363 = sshll.u32 %s1, 4
          %s364 = int_to_ptr.hbm [resolvable:$true] %s363
          %s365 = sshll.u32 [#allocation2], 4
          %s366 = int_to_ptr.vmem [resolvable:$true] %s365
          %368 = dma.hbm_to_vmem [thread:$0]  %s364, 16, %s366, [#allocation3]
        $region16: #{tpu_custom_call.1} parent=11 // pred_fallthru
          _
        // Predicated region
        $region17: #{tpu_custom_call.1} parent=11 // pred_check
          %p369 = pneg %p104
        $region18: #{tpu_custom_call.1} parent=11 // pred_check_branch
          %371 = sbr.rel (%p369) target = $region20
        $region19: #{tpu_custom_call.1} parent=11 // pred_region
          _
        $region20: #{tpu_custom_call.1} parent=11 // pred_fallthru
          _
        // Predicated region
        $region21: #{tpu_custom_call.1} parent=11 // pred_check
          %p372 = pneg %p125
        $region22: #{tpu_custom_call.1} parent=11 // pred_check_branch
          %374 = sbr.rel (%p372) target = $region24
        $region23: #{tpu_custom_call.1} parent=11 // pred_region
          _
        $region24: #{tpu_custom_call.1} parent=11 // pred_fallthru
          _
        // Predicated region
        $region25: #{tpu_custom_call.1} parent=11 // pred_check
          %p375 = pneg %p146
        $region26: #{tpu_custom_call.1} parent=11 // pred_check_branch
          %377 = sbr.rel (%p375) target = $region28
        $region27: #{tpu_custom_call.1} parent=11 // pred_region
          _
        $region28: #{tpu_custom_call.1} parent=11 // pred_fallthru
          _
        // Predicated region
        $region29: #{tpu_custom_call.1} parent=11 // pred_check
          %p378 = pneg %p167
        $region30: #{tpu_custom_call.1} parent=11 // pred_check_branch
          %380 = sbr.rel (%p378) target = $region32
        $region31: #{tpu_custom_call.1} parent=11 // pred_region
          _
        $region32: #{tpu_custom_call.1} parent=11 // pred_fallthru
          _
        // Predicated region
        $region33: #{tpu_custom_call.1} parent=11 // pred_check
          %p381 = pneg %p188
        $region34: #{tpu_custom_call.1} parent=11 // pred_check_branch
          %383 = sbr.rel (%p381) target = $region36
        $region35: #{tpu_custom_call.1} parent=11 // pred_region
          _
        $region36: #{tpu_custom_call.1} parent=11 // pred_fallthru
          _
        // Predicated region
        $region37: #{tpu_custom_call.1} parent=11 // pred_check
          %p384 = pneg %p209
        $region38: #{tpu_custom_call.1} parent=11 // pred_check_branch
          %386 = sbr.rel (%p384) target = $region40
        $region39: #{tpu_custom_call.1} parent=11 // pred_region
          %388 = vsyncadd [#allocation6], 0
          %s389 = sshll.u32 %s7, 4
          %s390 = int_to_ptr.hbm [resolvable:$true] %s389
          %s391 = sshll.u32 [#allocation5], 4
          %s392 = int_to_ptr.vmem [resolvable:$true] %s391
          %397 = dma.hbm_to_vmem [thread:$0]  %s390, 256, %s392, [#allocation6], 64, 64, 4
        $region40: #{tpu_custom_call.1} parent=11 // pred_fallthru
          _
        // Predicated region
        $region41: #{tpu_custom_call.1} parent=11 // pred_check
          %p398 = pneg %p230
        $region42: #{tpu_custom_call.1} parent=11 // pred_check_branch
          %400 = sbr.rel (%p398) target = $region44
        $region43: #{tpu_custom_call.1} parent=11 // pred_region
          _
        $region44: #{tpu_custom_call.1} parent=11 // pred_fallthru
          _
        // Predicated region
        $region45: #{tpu_custom_call.1} parent=11 // pred_check
          %p401 = pneg %p251
        $region46: #{tpu_custom_call.1} parent=11 // pred_check_branch
          %403 = sbr.rel (%p401) target = $region48
        $region47: #{tpu_custom_call.1} parent=11 // pred_region
          _
        $region48: #{tpu_custom_call.1} parent=11 // pred_fallthru
          _
        // Predicated region
        $region49: #{tpu_custom_call.1} parent=11 // pred_check
          %p404 = pneg %p272
        $region50: #{tpu_custom_call.1} parent=11 // pred_check_branch
          %406 = sbr.rel (%p404) target = $region52
        $region51: #{tpu_custom_call.1} parent=11 // pred_region
          _
        $region52: #{tpu_custom_call.1} parent=11 // pred_fallthru
          _
        // Predicated region
        $region53: #{tpu_custom_call.1} parent=11 // pred_check
          %p407 = pneg %p293
        $region54: #{tpu_custom_call.1} parent=11 // pred_check_branch
          %409 = sbr.rel (%p407) target = $region56
        $region55: #{tpu_custom_call.1} parent=11 // pred_region
          _
        $region56: #{tpu_custom_call.1} parent=11 // pred_fallthru
          _
        // Predicated region
        $region57: #{tpu_custom_call.1} parent=11 // pred_check
          %p410 = pneg %p314
        $region58: #{tpu_custom_call.1} parent=11 // pred_check_branch
          %412 = sbr.rel (%p410) target = $region60
        $region59: #{tpu_custom_call.1} parent=11 // pred_region
          _
        $region60: #{tpu_custom_call.1} parent=11 // pred_fallthru
          _
      $region12: #{tpu_custom_call.1} parent=5 // pred_fallthru
        _
      %p413 = scmp.lt.s32.totalorder %s24, 2
      // Predicated region
      $region61: #{tpu_custom_call.1} parent=5 // pred_check
        %p414 = pneg %p413
      $region62: #{tpu_custom_call.1} parent=5 // pred_check_branch
        %416 = sbr.rel (%p414) target = $region64
      $region63: #{tpu_custom_call.1} parent=5 // pred_region
        // Predicated region
        $region65: #{tpu_custom_call.1} parent=63 // pred_check
          %p417 = pneg %p56
        $region66: #{tpu_custom_call.1} parent=63 // pred_check_branch
          %419 = sbr.rel (%p417) target = $region68
        $region67: #{tpu_custom_call.1} parent=63 // pred_region
          %p420 = scmp.lt.s32.totalorder %s31, 1
          %s421 = scalar_select %p420, %s31, 1
          %s422 = smul.addr %s421, 8
          %s423 = scalar_lea.vmem %s0, %s422
        $region68: #{tpu_custom_call.1} parent=63 // pred_fallthru
          _
      $region64: #{tpu_custom_call.1} parent=5 // pred_fallthru
        _
      %p424 = scmp.le.s32.totalorder 1, %s24
      %p425 = scmp.lt.s32.totalorder %s24, 3
      %p426 = pnand %p424, %p425
      %p427 = pneg %p426
      // Predicated region
      $region69: #{tpu_custom_call.1} parent=5 // pred_check
        _
      $region70: #{tpu_custom_call.1} parent=5 // pred_check_branch
        %429 = sbr.rel (%p426) target = $region72
      $region71: #{tpu_custom_call.1} parent=5 // pred_region
        %s430 = ssub.s32 %s24, 1
        // Predicated region
        $region73: #{tpu_custom_call.1} parent=71 // pred_check
          %p431 = pneg %p83
        $region74: #{tpu_custom_call.1} parent=71 // pred_check_branch
          %433 = sbr.rel (%p431) target = $region76
        $region75: #{tpu_custom_call.1} parent=71 // pred_region
          %435 = dma.done [#allocation3], 16
        $region76: #{tpu_custom_call.1} parent=71 // pred_fallthru
          _
        // Predicated region
        $region77: #{tpu_custom_call.1} parent=71 // pred_check
          %p436 = pneg %p209
        $region78: #{tpu_custom_call.1} parent=71 // pred_check_branch
          %438 = sbr.rel (%p436) target = $region80
        $region79: #{tpu_custom_call.1} parent=71 // pred_region
          %440 = dma.done [#allocation6], 256
        $region80: #{tpu_custom_call.1} parent=71 // pred_fallthru
          _
        %p441 = scmp.lt.s32.totalorder %s33, 1
        %s442 = scalar_select %p441, %s33, 1
        %s443 = smul.addr %s442, 8
        %s444 = scalar_lea.vmem %s0, %s443
        %p445 = pneg %p62
        %p446 = pneg %p59
        %p447 = pneg %p83
        %p448 = pneg %p80
        %p449 = pneg %p104
        %p450 = pneg %p101
        %p451 = pneg %p125
        %p452 = pneg %p122
        %p453 = pneg %p146
        %p454 = pneg %p143
        %p455 = pneg %p167
        %p456 = pneg %p164
        %p457 = pneg %p188
        %p458 = pneg %p185
        %p459 = pneg %p209
        %p460 = pneg %p206
        %p461 = pneg %p230
        %p462 = pneg %p227
        %p463 = pneg %p251
        %p464 = pneg %p248
        %p465 = pneg %p272
        %p466 = pneg %p269
        %p467 = pneg %p293
        %p468 = pneg %p290
        %p469 = pneg %p314
        %p470 = pneg %p311
        %p471 = pneg %p342
        %p472 = pneg %p339
        %s473 = sand.u32 %s329, 1
        %s474 = scalar_lea.sflag [#allocation4], %s473
        %s475 = sand.u32 %s329, 1
        %s476 = smul.addr %s475, 8
        %s477 = scalar_lea.vmem [#allocation7], %s476
        %p478 = scmp.lt.s32.totalorder %s33, 1
        %s479 = scalar_select %p478, %s33, 1
        %s480 = smul.addr %s479, 8
        %s481 = scalar_lea.vmem %s0, %s480
        %v483 = vld [vmem:[%s481] sm:$0xff]
        %v484 = vld [vmem:[#allocation2] sm:$0x1]
        %v485 = vld [vmem:[%s2] sm:$0x1]
        %vm486 = vcmask 261120
        %v487 = vsel %vm486, %v483, 0.0
        %488 = vadd.xlane.f32.xlu0 %v487
        %v489 = vpop.xlane.xlu0 %488
        %v490 = vrcp.pop 32.0
        %v491 = vmul.f32 32.0, %v490
        %v492 = vsub.f32 1.0, %v491
        %v493 = vmul.f32 %v490, %v492
        %v494 = vadd.f32 %v490, %v493
        %vm495 = vweird.f32 %v490
        %v496 = vsel %vm495, %v490, %v494
        %v497 = vmul.f32 %v489, %v496
        %v498 = vsub.f32 %v483, %v497
        %v499 = vmul.f32 %v498, %v498
        %v500 = vsel %vm486, %v499, 0.0
        %501 = vadd.xlane.f32.xlu0 %v500
        %v502 = vpop.xlane.xlu0 %501
        %v503 = vmul.f32 %v502, %v496
        %v504 = vadd.f32 %v503, 1e-05
        %v505 = vrsqrt.pop %v504
        %v506 = vmul.f32 %v505, %v504
        %v507 = vmul.f32 %v506, %v505
        %v508 = vmul.f32 0.5, %v507
        %v509 = vsub.f32 1.5, %v508
        %v510 = vmul.f32 %v505, %v509
        %vm511 = vweird.f32 %v504
        %vm512 = vweird.f32 %v505
        %vm513 = vmor %vm511, %vm512
        %v514 = vsel %vm513, %v505, %v510
        %v515 = vmul.f32 %v498, %v514
        %v517 = vperm.slane %v484, 0
        %v519 = vmul.f32 %v515, %v517
        %v521 = vperm.slane %v485, 0
        %v523 = vadd.f32 %v519, %v521
        %v524 = vpack.c.bf16 %v523, %v523
        %v525 = vld [vmem:[%s3] sm:$0xf]
        %v526 = vld [vmem:[%s3 + $0x4] sm:$0xf]
        %v527 = vld [vmem:[%s3 + $0x8] sm:$0xf]
        %v528 = vld [vmem:[%s3 + $0xc] sm:$0xf]
        %v533 = vunpack.c.l.b16 %v525
        %v534 = vunpack.c.l.b16 %v526
        %v535 = vunpack.c.l.b16 %v527
        %v536 = vunpack.c.l.b16 %v528
        %v537 = vpack.c.b16 %v534, %v533
        %v538 = vpack.c.b16 %v536, %v535
        %v542 = vsel %vm486, %v524, 0
        %544 = vmatpush.bf16.msra.mxu0 0
        %545 = vmatpush.bf16.msra.mxu0 0
        %546 = vmatpush.bf16.msra.mxu0 0
        %547 = vmatpush.bf16.msra.mxu0 0
        %548 = vmatpush.bf16.msra.mxu0 0
        %549 = vmatpush.bf16.msra.mxu0 0
        %550 = vmatpush.bf16.msra.mxu0 %v538
        %551 = vmatpush.bf16.msra.mxu0 %v537
        %552 = vmatmul.bf16.gmra.mxu0 %v542
        %v553 = vpop.f32.mrf.mxu0
        %v554 = vadd.f32 0.0, %v553
        %v555 = vpop.f32.mrf.mxu0
        %556 = vdwg.mxu0
        %v557 = vpack.c.bf16 %v554, %v554
        %v559 = vunpack.c.l.b16 %v557
        %v560 = vpack.c.b16 %v559, %v559
        %561 = vrot.lane.b32.xlu0 %v560, 96
        %v562 = vpop.permute.xlu0 %561
        %vm563 = vcmask 130048
        %v565 = vsel %vm563, %v557, 0
        %v568 = vsel %vm563, %v562, 0
        %570 = vmatpush.bf16.xpose.msra.mxu0 0
        %571 = vmatpush.bf16.xpose.msra.mxu0 0
        %572 = vmatpush.bf16.xpose.msra.mxu0 0
        %573 = vmatpush.bf16.xpose.msra.mxu0 0
        %574 = vmatpush.bf16.xpose.msra.mxu0 0
        %575 = vmatpush.bf16.xpose.msra.mxu0 0
        %576 = vmatpush.bf16.xpose.msra.mxu0 0
        %577 = vmatpush.bf16.xpose.msra.mxu0 %v568
        %578 = vmatmul.bf16.gmra.mxu0 %v565
        %v579 = vpop.f32.mrf.mxu0
        %v580 = vadd.f32 0.0, %v579
        %v581 = vpop.f32.mrf.mxu0
        %582 = vdwg.mxu0
        %vm583 = vcmask 64512
        %v584 = vsel %vm583, %v580, -inf
        %585 = vmax.xlane.f32.xlu0 %v584
        %v586 = vpop.xlane.xlu0 %585
        %v587 = vsub.f32 %v580, %v586
        %v588 = vmul.f32 %v587, 1.442695
        %v589 = vpow.pop %v588
        %v590 = vsel %vm583, %v589, 0.0
        %591 = vadd.xlane.f32.xlu0 %v590
        %v592 = vpop.xlane.xlu0 %591
        %v593 = vrcp.pop %v592
        %v594 = vmul.f32 %v589, %v593
        %v595 = vpack.c.bf16 %v594, %v594
        %596 = vrot.lane.b32.xlu0 %v560, 64
        %v597 = vpop.permute.xlu0 %596
        %v599 = vsel %vm583, %v595, 0
        %vm601 = vcmask 1043456
        %v603 = vsel %vm601, %v597, 0
        %605 = vmatpush.bf16.msra.mxu0 0
        %606 = vmatpush.bf16.msra.mxu0 0
        %607 = vmatpush.bf16.msra.mxu0 0
        %608 = vmatpush.bf16.msra.mxu0 0
        %609 = vmatpush.bf16.msra.mxu0 0
        %610 = vmatpush.bf16.msra.mxu0 0
        %611 = vmatpush.bf16.msra.mxu0 0
        %612 = vmatpush.bf16.msra.mxu0 %v603
        %613 = vmatmul.bf16.gmra.mxu0 %v599
        %v614 = vpop.f32.mrf.mxu0
        %v615 = vadd.f32 0.0, %v614
        %v616 = vpop.f32.mrf.mxu0
        %617 = vdwg.mxu0
        %618 = vrot.lane.b32.xlu0 %v560, 112
        %v619 = vpop.permute.xlu0 %618
        %620 = vrot.lane.b32.xlu0 %v560, 80
        %v621 = vpop.permute.xlu0 %620
        %v623 = vsel %vm563, %v619, 0
        %v626 = vsel %vm563, %v621, 0
        %628 = vmatpush.bf16.xpose.msra.mxu0 0
        %629 = vmatpush.bf16.xpose.msra.mxu0 0
        %630 = vmatpush.bf16.xpose.msra.mxu0 0
        %631 = vmatpush.bf16.xpose.msra.mxu0 0
        %632 = vmatpush.bf16.xpose.msra.mxu0 0
        %633 = vmatpush.bf16.xpose.msra.mxu0 0
        %634 = vmatpush.bf16.xpose.msra.mxu0 0
        %635 = vmatpush.bf16.xpose.msra.mxu0 %v626
        %636 = vmatmul.bf16.gmra.mxu0 %v623
        %v637 = vpop.f32.mrf.mxu0
        %v638 = vadd.f32 0.0, %v637
        %v639 = vpop.f32.mrf.mxu0
        %640 = vdwg.mxu0
        %v641 = vsel %vm583, %v638, -inf
        %642 = vmax.xlane.f32.xlu0 %v641
        %v643 = vpop.xlane.xlu0 %642
        %v644 = vsub.f32 %v638, %v643
        %v645 = vmul.f32 %v644, 1.442695
        %v646 = vpow.pop %v645
        %v647 = vsel %vm583, %v646, 0.0
        %648 = vadd.xlane.f32.xlu0 %v647
        %v649 = vpop.xlane.xlu0 %648
        %v650 = vrcp.pop %v649
        %v651 = vmul.f32 %v646, %v650
        %v652 = vpack.c.bf16 %v651, %v651
        %653 = vrot.lane.b32.xlu0 %v560, 48
        %v654 = vpop.permute.xlu0 %653
        %v656 = vsel %vm583, %v652, 0
        %v659 = vsel %vm601, %v654, 0
        %661 = vmatpush.bf16.msra.mxu0 0
        %662 = vmatpush.bf16.msra.mxu0 0
        %663 = vmatpush.bf16.msra.mxu0 0
        %664 = vmatpush.bf16.msra.mxu0 0
        %665 = vmatpush.bf16.msra.mxu0 0
        %666 = vmatpush.bf16.msra.mxu0 0
        %667 = vmatpush.bf16.msra.mxu0 0
        %668 = vmatpush.bf16.msra.mxu0 %v659
        %669 = vmatmul.bf16.gmra.mxu0 %v656
        %v670 = vpop.f32.mrf.mxu0
        %v671 = vadd.f32 0.0, %v670
        %v672 = vpop.f32.mrf.mxu0
        %673 = vdwg.mxu0
        %675 = vrot.lane.b32.xlu0 %v671, 16
        %v676 = vpop.permute.xlu0 %675
        %v678 = vsel %vm563, %v615, %v676
        %v679 = vpack.c.bf16 %v678, %v678
        %v680 = vld [vmem:[%s4] sm:$0xf]
        %v681 = vld [vmem:[%s4 + $0x4] sm:$0xf]
        %v682 = vld [vmem:[%s4 + $0x8] sm:$0xf]
        %v683 = vld [vmem:[%s4 + $0xc] sm:$0xf]
        %v688 = vunpack.c.l.b16 %v680
        %v689 = vunpack.c.l.b16 %v681
        %v690 = vunpack.c.l.b16 %v682
        %v691 = vunpack.c.l.b16 %v683
        %v692 = vpack.c.b16 %v689, %v688
        %v693 = vpack.c.b16 %v691, %v690
        %v697 = vsel %vm486, %v679, 0
        %699 = vmatpush.bf16.msra.mxu0 0
        %700 = vmatpush.bf16.msra.mxu0 0
        %701 = vmatpush.bf16.msra.mxu0 0
        %702 = vmatpush.bf16.msra.mxu0 0
        %703 = vmatpush.bf16.msra.mxu0 0
        %704 = vmatpush.bf16.msra.mxu0 0
        %705 = vmatpush.bf16.msra.mxu0 %v693
        %706 = vmatpush.bf16.msra.mxu0 %v692
        %707 = vmatmul.bf16.gmra.mxu0 %v697
        %v708 = vpop.f32.mrf.mxu0
        %v709 = vadd.f32 %v483, %v708
        %v710 = vpop.f32.mrf.mxu0
        %711 = vdwg.mxu0
        %v712 = vld [vmem:[%s5] sm:$0x1]
        %v713 = vld [vmem:[%s6] sm:$0x1]
        %v714 = vsel %vm486, %v709, 0.0
        %715 = vadd.xlane.f32.xlu0 %v714
        %v716 = vpop.xlane.xlu0 %715
        %v717 = vmul.f32 %v716, %v496
        %v718 = vsub.f32 %v709, %v717
        %v719 = vmul.f32 %v718, %v718
        %v720 = vsel %vm486, %v719, 0.0
        %721 = vadd.xlane.f32.xlu0 %v720
        %v722 = vpop.xlane.xlu0 %721
        %v723 = vmul.f32 %v722, %v496
        %v724 = vadd.f32 %v723, 1e-05
        %v725 = vrsqrt.pop %v724
        %v726 = vmul.f32 %v725, %v724
        %v727 = vmul.f32 %v726, %v725
        %v728 = vmul.f32 0.5, %v727
        %v729 = vsub.f32 1.5, %v728
        %v730 = vmul.f32 %v725, %v729
        %vm731 = vweird.f32 %v724
        %vm732 = vweird.f32 %v725
        %vm733 = vmor %vm731, %vm732
        %v734 = vsel %vm733, %v725, %v730
        %v735 = vmul.f32 %v718, %v734
        %v737 = vperm.slane %v712, 0
        %v739 = vmul.f32 %v735, %v737
        %v741 = vperm.slane %v713, 0
        %v743 = vadd.f32 %v739, %v741
        %v744 = vpack.c.bf16 %v743, %v743
        %v745 = vld [vmem:[#allocation5] sm:$0xf]
        %v746 = vld [vmem:[#allocation5 + $0x4] sm:$0xf]
        %v747 = vld [vmem:[#allocation5 + $0x8] sm:$0xf]
        %v748 = vld [vmem:[#allocation5 + $0xc] sm:$0xf]
        %v749 = vld [vmem:[%s8] sm:$0x1]
        %v751 = vperm.slane %v749, 0
        %v757 = vunpack.c.l.b16 %v745
        %v758 = vunpack.c.l.b16 %v746
        %v759 = vunpack.c.l.b16 %v747
        %v760 = vunpack.c.l.b16 %v748
        %v761 = vpack.c.b16 %v758, %v757
        %v762 = vpack.c.b16 %v760, %v759
        %v766 = vsel %vm486, %v744, 0
        %768 = vmatpush.bf16.msra.mxu0 0
        %769 = vmatpush.bf16.msra.mxu0 0
        %770 = vmatpush.bf16.msra.mxu0 0
        %771 = vmatpush.bf16.msra.mxu0 0
        %772 = vmatpush.bf16.msra.mxu0 0
        %773 = vmatpush.bf16.msra.mxu0 0
        %774 = vmatpush.bf16.msra.mxu0 %v762
        %775 = vmatpush.bf16.msra.mxu0 %v761
        %776 = vmatmul.bf16.gmra.mxu0 %v766
        %v777 = vpop.f32.mrf.mxu0
        %v778 = vadd.f32 %v751, %v777
        %v779 = vpop.f32.mrf.mxu0
        %780 = vdwg.mxu0
        %v781 = vmul.f32 %v778, 0.5
        %v782 = vmul.f32 %v778, 0.70710677
        %v783 = vmul.f32 %v782, %v782
        %v784 = vmin.f32 16.0, %v783
        %v785 = vmul.f32 %v784, 2.1237322e-06
        %v786 = vadd.f32 %v785, 0.00028619796
        %v787 = vmul.f32 %v784, %v786
        %v788 = vadd.f32 %v787, 0.0036580483
        %v789 = vmul.f32 %v784, %v788
        %v790 = vadd.f32 %v789, 0.05243302
        %v791 = vmul.f32 %v784, %v790
        %v792 = vadd.f32 %v791, 0.18741608
        %v793 = vmul.f32 %v784, %v792
        %v794 = vadd.f32 %v793, 1.1283791
        %v795 = vmul.f32 %v782, %v794
        %v796 = vmul.f32 %v784, 3.8918573e-05
        %v797 = vadd.f32 %v796, 0.001143296
        %v798 = vmul.f32 %v784, %v797
        %v799 = vadd.f32 %v798, 0.014752088
        %v800 = vmul.f32 %v784, %v799
        %v801 = vadd.f32 %v800, 0.112945676
        %v802 = vmul.f32 %v784, %v801
        %v803 = vadd.f32 %v802, 0.4994258
        %v804 = vmul.f32 %v784, %v803
        %v805 = vadd.f32 %v804, 1.0
        %v806 = vrcp.pop %v805
        %v807 = vmul.f32 %v805, %v806
        %v808 = vsub.f32 1.0, %v807
        %v809 = vmul.f32 %v806, %v808
        %v810 = vadd.f32 %v806, %v809
        %vm811 = vweird.f32 %v805
        %vm812 = vweird.f32 %v806
        %vm813 = vmor %vm811, %vm812
        %v814 = vsel %vm813, %v806, %v810
        %v815 = vand.u32 2147483647, %v805
        %vm816 = vcmp.eq.f32.partialorder %v815, 8.507059e+37
        %v817 = vand.u32 %v805, 2147483648
        %v818 = vor.u32 1.1754944e-38, %v817
        %v819 = vsel %vm816, %v818, %v814
        %v820 = vmul.f32 %v795, %v819
        %v821 = vmin.f32 %v820, 1.0
        %v822 = vmax.f32 %v821, -1.0
        %v823 = vadd.f32 %v822, 1.0
        %v824 = vmul.f32 %v781, %v823
        %v825 = vpack.c.bf16 %v824, %v824
        %v826 = vld [vmem:[%s9] sm:$0xf]
        %v827 = vld [vmem:[%s9 + $0x4] sm:$0xf]
        %v828 = vld [vmem:[%s9 + $0x8] sm:$0xf]
        %v829 = vld [vmem:[%s9 + $0xc] sm:$0xf]
        %v830 = vld [vmem:[%s9 + $0x10] sm:$0xf]
        %v831 = vld [vmem:[%s9 + $0x14] sm:$0xf]
        %v832 = vld [vmem:[%s9 + $0x18] sm:$0xf]
        %v833 = vld [vmem:[%s9 + $0x1c] sm:$0xf]
        %v834 = vld [vmem:[%s10] sm:$0x1]
        %v836 = vperm.slane %v834, 0
        %v846 = vunpack.c.l.b16 %v826
        %v847 = vunpack.c.l.b16 %v827
        %v848 = vunpack.c.l.b16 %v828
        %v849 = vunpack.c.l.b16 %v829
        %v850 = vunpack.c.l.b16 %v830
        %v851 = vunpack.c.l.b16 %v831
        %v852 = vunpack.c.l.b16 %v832
        %v853 = vunpack.c.l.b16 %v833
        %v854 = vpack.c.b16 %v847, %v846
        %v855 = vpack.c.b16 %v849, %v848
        %v856 = vpack.c.b16 %v851, %v850
        %v857 = vpack.c.b16 %v853, %v852
        %vm862 = vcmask 523264
        %v864 = vsel %vm862, %v825, 0
        %866 = vmatpush.bf16.msra.mxu0 0
        %867 = vmatpush.bf16.msra.mxu0 0
        %868 = vmatpush.bf16.msra.mxu0 0
        %869 = vmatpush.bf16.msra.mxu0 0
        %870 = vmatpush.bf16.msra.mxu0 %v857
        %871 = vmatpush.bf16.msra.mxu0 %v856
        %872 = vmatpush.bf16.msra.mxu0 %v855
        %873 = vmatpush.bf16.msra.mxu0 %v854
        %874 = vmatmul.bf16.gmra.mxu0 %v864
        %v875 = vpop.f32.mrf.mxu0
        %v876 = vadd.f32 %v836, %v875
        %v877 = vpop.f32.mrf.mxu0
        %878 = vdwg.mxu0
        %v879 = vadd.f32 %v876, %v709
        %880 = vst.msk [vmem:[%s477] sm:$0xff] %vm486, %v879
        %s881 = sand.u32 %s329, 1
        %s882 = scalar_lea.sflag [#allocation4], %s881
        %s883 = sand.u32 %s329, 1
        %s884 = smul.addr %s883, 8
        %s885 = scalar_lea.vmem [#allocation7], %s884
        // Predicated region
        $region81: #{tpu_custom_call.1} parent=71 // pred_check
          %p886 = pneg %p339
        $region82: #{tpu_custom_call.1} parent=71 // pred_check_branch
          %888 = sbr.rel (%p886) target = $region84
        $region83: #{tpu_custom_call.1} parent=71 // pred_region
          %890 = vsyncadd %s882, 0
          %s891 = sadd.s32 %s34, %s33
          %s892 = smul.addr %s891, 8
          %s893 = scalar_lea.hbm %s13, %s892
          %s895 = sshll.u32 %s885, 4
          %s896 = int_to_ptr.vmem [resolvable:$true] %s895
          %s897 = sshll.u32 %s893, 4
          %s898 = int_to_ptr.hbm [resolvable:$true] %s897
          %900 = dma.vmem_to_hbm [thread:$0]  %s896, 128, %s898, %s882
        $region84: #{tpu_custom_call.1} parent=71 // pred_fallthru
          _
      $region72: #{tpu_custom_call.1} parent=5 // pred_fallthru
        _
      %p901 = scmp.le.s32.totalorder 2, %s24
      // Predicated region
      $region85: #{tpu_custom_call.1} parent=5 // pred_check
        %p902 = pneg %p901
      $region86: #{tpu_custom_call.1} parent=5 // pred_check_branch
        %904 = sbr.rel (%p902) target = $region88
      $region87: #{tpu_custom_call.1} parent=5 // pred_region
        %s905 = ssub.s32 %s24, 2
        // Predicated region
        $region89: #{tpu_custom_call.1} parent=87 // pred_check
          %p906 = pneg %p345
        $region90: #{tpu_custom_call.1} parent=87 // pred_check_branch
          %908 = sbr.rel (%p906) target = $region92
        $region91: #{tpu_custom_call.1} parent=87 // pred_region
          %s909 = sand.u32 %s330, 1
          %s910 = scalar_lea.sflag [#allocation4], %s909
          %s911 = sand.u32 %s330, 1
          %s912 = smul.addr %s911, 8
          %s913 = scalar_lea.vmem [#allocation7], %s912
          %915 = dma.done %s910, 128
        $region92: #{tpu_custom_call.1} parent=87 // pred_fallthru
          _
      $region88: #{tpu_custom_call.1} parent=5 // pred_fallthru
        _
    $region6: #{tpu_custom_call.1} parent=1 // loop_footer
      %s28 = sadd.s32 1, %s24
    $region7: #{tpu_custom_call.1} parent=1 // loop_footer_branch
      %23 = sbr.rel target = $region3
    $region8: #{tpu_custom_call.1} parent=1 // loop_exit
      _
    %916 = vsyncpa [#allocation3], 1
    %s917 = scalar_lea.sflag [#allocation3], 1
    %918 = vsyncpa %s917, 1
    %919 = vsyncpa [#allocation6], 1
    %920 = vsyncpa [#allocation4], 1
    %s921 = scalar_lea.sflag [#allocation4], 1
    %922 = vsyncpa %s921, 1

</llo_original>
